<compile_context>
chip_gen: v7x
topology: tpu7x:2x2x1
jax: 0.10.0
libtpu: 0.0.40
codegen_flags: <defaults>
</compile_context>

<pallas_src>
import jax
import jax.numpy as jnp
from jax.experimental import pallas as pl
from jax.experimental.pallas import tpu as pltpu

# Small but lane-aligned shapes (H, F multiples of 128; V padded past the
# "real" vocab of 100 -> 512 so the HBM-gather structure is exercised).
B = 2                      # number of (query, pos, neg) triplets
S = 8                      # sequence length
H = 128                    # hidden size (last_hidden_state dim)
F = 256                    # MLP intermediate size
V = 512                    # (padded) vocab size

TOK_PER_TRIPLET = 3 * S    # tokens handled by one grid step (q + pos + neg)
N_TOK = B * TOK_PER_TRIPLET
OUT_W = 128                # lane-dense packed output row width
assert 2 * B + 1 <= OUT_W


# ----------------------------------------------------------------------------
# Kernel 1: per-triplet token encoder + masked mean pooling.
#   grid = (B,), parallel.  One step handles the 3 sequences of one triplet.
#   ids_ref : (N_TOK,) int32 in SMEM (scalar prefetch) -- flat [b, {q,p,n}, S]
#   mask_ref: (1, 3, S) f32 block of the (B, 3, S) attention masks
#   w1/b1/w2/b2: MLP params, resident across the grid (constant index_map)
#   emb_ref : (V, H) f32 embedding table left in HBM (pl.ANY); row-gathered
#   pooled_ref: (1, 3, H) f32 output block -> pooled[b, {q,p,n}, :]
# ----------------------------------------------------------------------------
def _encode_kernel(ids_ref, mask_ref, w1_ref, b1_ref, w2_ref, b2_ref, emb_ref,
                   pooled_ref, x_buf, sems):
    b = pl.program_id(0)
    base = b * TOK_PER_TRIPLET

    # ---- real gather: DMA just the 3*S embedding rows this triplet needs ----
    @pl.loop(0, TOK_PER_TRIPLET)
    def _(t):
        row = ids_ref[base + t]
        pltpu.make_async_copy(emb_ref.at[row], x_buf.at[t], sems.at[t]).start()

    @pl.loop(0, TOK_PER_TRIPLET)
    def _(t):
        pltpu.make_async_copy(emb_ref.at[0], x_buf.at[t], sems.at[t]).wait()

    # ---- synthetic token-wise MLP backbone ("last_hidden_state") ------------
    # bf16 MXU operands, f32 accumulation; elementwise math kept in f32 (v5e).
    x = x_buf[...].astype(jnp.bfloat16)                              # (3S, H)
    h = jnp.dot(x, w1_ref[...], preferred_element_type=jnp.float32) + b1_ref[...]
    h = jax.nn.gelu(h)                                               # (3S, F) f32
    y = (jnp.dot(h.astype(jnp.bfloat16), w2_ref[...],
                 preferred_element_type=jnp.float32) + b2_ref[...])  # (3S, H) f32

    # ---- masked mean pooling (per sequence), exact divide --------------------
    y3 = y.reshape(3, S, H)                                          # (3, S, H)
    m = mask_ref[0]                                                  # (3, S)
    sum_y = jnp.sum(y3 * m[:, :, None], axis=1)                      # (3, H)
    cnt = jnp.sum(m, axis=1, keepdims=True)                          # (3, 1)
    pooled = sum_y / jnp.maximum(cnt, 1e-9)                          # torch.clamp(min=1e-9)
    pooled_ref[0] = pooled


# ----------------------------------------------------------------------------
# Kernel 2: pairwise dot-product scores + contrastive CrossEntropy loss.
# Output packed into a single lane-dense (1, 128) row:
#   lanes [0, B)   -> pos_scores
#   lanes [B, 2B)  -> neg_scores
#   lane  2B       -> loss
# ----------------------------------------------------------------------------
def _score_loss_kernel(q_ref, p_ref, n_ref, out_ref):
    q = q_ref[...]                                                   # (B, H) f32
    p = p_ref[...]
    n = n_ref[...]

    # score_pairs: scores[i] = dot(q_vectors[i], d_vectors[i])  (== torch.bmm)
    pos = jnp.sum(q * p, axis=-1, keepdims=True)                     # (B, 1)
    neg = jnp.sum(q * n, axis=-1, keepdims=True)                     # (B, 1)

    # CrossEntropyLoss(cat(pos, neg), cat(ones, zeros)) with soft targets on an
    # unbatched logit vector: loss = sum_k t_k*(lse - x_k) = B*lse - sum(pos).
    # (mean and sum reductions coincide for the unbatched soft-target case.)
    m = jnp.maximum(jnp.max(pos, keepdims=True), jnp.max(neg, keepdims=True))  # (1,1)
    se = (jnp.sum(jnp.exp(pos - m), keepdims=True)
          + jnp.sum(jnp.exp(neg - m), keepdims=True))                # (1, 1)
    lse = m + jnp.log(se)                                            # (1, 1)
    loss = jnp.float32(B) * lse - jnp.sum(pos, keepdims=True)        # (1, 1)

    # Pack [pos(0:B), neg(B:2B), loss] into one lane-dense row (no scatter).
    lane = jax.lax.broadcasted_iota(jnp.int32, (B, OUT_W), 1)
    row_id = jax.lax.broadcasted_iota(jnp.int32, (B, OUT_W), 0)
    packed = jnp.sum(jnp.where(lane == row_id, pos, 0.0), axis=0, keepdims=True)
    packed = packed + jnp.sum(jnp.where(lane == row_id + B, neg, 0.0),
                              axis=0, keepdims=True)
    lane1 = jax.lax.broadcasted_iota(jnp.int32, (1, OUT_W), 1)
    packed = packed + jnp.where(lane1 == 2 * B, loss, 0.0)
    out_ref[...] = packed


def dense_biencoder_forward(params, emb_table, queries, pos_docs, neg_docs):
    """Returns (loss, pos_scores, neg_scores), mirroring DenseBiEncoder.forward."""
    w1, b1, w2, b2 = params
    q_ids, q_mask = queries
    p_ids, p_mask = pos_docs
    n_ids, n_mask = neg_docs

    # Layout plumbing: group tokens by triplet so each grid step owns a
    # contiguous [q | pos | neg] slab of 3*S tokens.
    ids = jnp.stack([q_ids, p_ids, n_ids], axis=1).astype(jnp.int32)        # (B, 3, S)
    mask = jnp.stack([q_mask, p_mask, n_mask], axis=1).astype(jnp.float32)  # (B, 3, S)
    ids_flat = ids.reshape(-1)                                              # (N_TOK,)

    # bf16 MXU operands (weights); biases stay f32 (added post-matmul in f32).
    w1b = w1.astype(jnp.bfloat16)
    w2b = w2.astype(jnp.bfloat16)
    b1f = b1.astype(jnp.float32)
    b2f = b2.astype(jnp.float32)
    emb_f32 = emb_table.astype(jnp.float32)

    pooled = pl.pallas_call(
        _encode_kernel,
        out_shape=jax.ShapeDtypeStruct((B, 3, H), jnp.float32),
        grid_spec=pltpu.PrefetchScalarGridSpec(
            num_scalar_prefetch=1,
            grid=(B,),
            in_specs=[
                pl.BlockSpec((1, 3, S), lambda b, ids: (b, 0, 0)),   # mask
                pl.BlockSpec((H, F), lambda b, ids: (0, 0)),         # w1 (resident)
                pl.BlockSpec((1, F), lambda b, ids: (0, 0)),         # b1 (resident)
                pl.BlockSpec((F, H), lambda b, ids: (0, 0)),         # w2 (resident)
                pl.BlockSpec((1, H), lambda b, ids: (0, 0)),         # b2 (resident)
                pl.BlockSpec(memory_space=pl.ANY),                   # emb stays in HBM
            ],
            out_specs=pl.BlockSpec((1, 3, H), lambda b, ids: (b, 0, 0)),
            scratch_shapes=[
                pltpu.VMEM((TOK_PER_TRIPLET, H), jnp.float32),       # gathered rows
                pltpu.SemaphoreType.DMA((TOK_PER_TRIPLET,)),         # gather sems
            ],
        ),
        compiler_params=pltpu.CompilerParams(
            dimension_semantics=("parallel",),
            vmem_limit_bytes=32 * 1024 * 1024,   # safe on v5e/v6e (128 MiB) and v7x (64 MiB)
        ),
    )(ids_flat, mask, w1b, b1f, w2b, b2f, emb_f32)

    q_vecs = pooled[:, 0, :]                                         # (B, H)
    p_vecs = pooled[:, 1, :]
    n_vecs = pooled[:, 2, :]

    out = pl.pallas_call(
        _score_loss_kernel,
        out_shape=jax.ShapeDtypeStruct((1, OUT_W), jnp.float32),
    )(q_vecs, p_vecs, n_vecs)

    pos_scores = out[0, 0:B]
    neg_scores = out[0, B:2 * B]
    loss = out[0, 2 * B]
    return loss, pos_scores, neg_scores


# ----------------------------------------------------------------------------
# Pure-JAX f32 reference (same synthetic backbone) for the correctness check.
# Kernel uses bf16 MXU operands, hence the moderate tolerance below.
# ----------------------------------------------------------------------------
def _reference_forward(params, emb_table, queries, pos_docs, neg_docs):
    w1, b1, w2, b2 = params

    def encode(ids, mask):
        x = emb_table[ids].astype(jnp.float32)                 # (B, S, H)
        h = jax.nn.gelu(x @ w1 + b1)
        y = h @ w2 + b2
        m = mask.astype(jnp.float32)[..., None]                # (B, S, 1)
        y = jnp.where(m == 0.0, 0.0, y)
        return jnp.sum(y, axis=1) / jnp.maximum(jnp.sum(m, axis=1), 1e-9)

    q = encode(*queries)
    p = encode(*pos_docs)
    n = encode(*neg_docs)
    pos = jnp.sum(q * p, axis=-1)
    neg = jnp.sum(q * n, axis=-1)
    logits = jnp.concatenate([pos, neg], axis=0)
    targets = jnp.concatenate([jnp.ones_like(pos), jnp.zeros_like(neg)], axis=0)
    lse = jax.scipy.special.logsumexp(logits)
    loss = jnp.sum(targets * (lse - logits))
    return loss, pos, neg


if __name__ == "__main__":
    key = jax.random.PRNGKey(0)
    k_emb, k_w1, k_b1, k_w2, k_b2, k_q, k_p, k_n = jax.random.split(key, 8)

    # Deterministic synthetic parameters.
    emb_table = jax.random.normal(k_emb, (V, H), jnp.float32) * 0.02
    params = (
        jax.random.normal(k_w1, (H, F), jnp.float32) * 0.05,   # W1
        jax.random.normal(k_b1, (1, F), jnp.float32) * 0.01,   # b1
        jax.random.normal(k_w2, (F, H), jnp.float32) * 0.05,   # W2
        jax.random.normal(k_b2, (1, H), jnp.float32) * 0.01,   # b2
    )

    def make_batch(k):
        ids = jax.random.randint(k, (B, S), 0, V, dtype=jnp.int32)
        # deterministic padding: first example full length, second has 3 pads.
        lengths = jnp.array([S, S - 3], dtype=jnp.int32)
        mask = (jnp.arange(S)[None, :] < lengths[:, None]).astype(jnp.int32)
        return ids, mask

    queries = make_batch(k_q)
    pos_docs = make_batch(k_p)
    neg_docs = make_batch(k_n)

    loss, pos_scores, neg_scores = dense_biencoder_forward(
        params, emb_table, queries, pos_docs, neg_docs
    )
    jax.block_until_ready((loss, pos_scores, neg_scores))

    ref_loss, ref_pos, ref_neg = _reference_forward(
        params, emb_table, queries, pos_docs, neg_docs
    )
    ok = (jnp.allclose(loss, ref_loss, rtol=2e-2, atol=2e-3)
          and jnp.allclose(pos_scores, ref_pos, rtol=2e-2, atol=2e-3)
          and jnp.allclose(neg_scores, ref_neg, rtol=2e-2, atol=2e-3))
    if not bool(ok):
        raise RuntimeError(
            f"mismatch: loss={loss} ref={ref_loss} pos={pos_scores} ref={ref_pos} "
            f"neg={neg_scores} ref={ref_neg}"
        )
    print("KERNEL_OK")
</pallas_src>

<mosaic_0001>
module attributes {stable_mosaic.version = 11 : i64} {
  func.func @_encode_kernel(%arg0: i32, %arg1: memref<48xi32, #tpu.memory_space<smem>>, %arg2: memref<1x3x8xf32, #tpu.memory_space<vmem>>, %arg3: memref<128x256xbf16, #tpu.memory_space<vmem>>, %arg4: memref<1x256xf32, #tpu.memory_space<vmem>>, %arg5: memref<256x128xbf16, #tpu.memory_space<vmem>>, %arg6: memref<1x128xf32, #tpu.memory_space<vmem>>, %arg7: memref<512x128xf32, #tpu.memory_space<any>>, %arg8: memref<1x3x128xf32, #tpu.memory_space<vmem>>, %arg9: memref<24x128xf32, #tpu.memory_space<vmem>>, %arg10: memref<24x!tpu.dma_semaphore, #tpu.memory_space<semaphore_mem>>) attributes {dimension_semantics = [#tpu.dimension_semantics<parallel>], iteration_bounds = array<i64: 2>, scalar_prefetch = 1 : i64, scratch_operands = 2 : i64, tpu.core_type = #tpu.core_type<tc>, window_params = [{transform_indices = @transform_0, window_bounds = array<i64: 1, 3, 8>}, {pipeline_mode = #tpu.pipeline_mode<synchronous>, transform_indices = @transform_1, window_bounds = array<i64: 128, 256>}, {pipeline_mode = #tpu.pipeline_mode<synchronous>, transform_indices = @transform_2, window_bounds = array<i64: 1, 256>}, {pipeline_mode = #tpu.pipeline_mode<synchronous>, transform_indices = @transform_3, window_bounds = array<i64: 256, 128>}, {pipeline_mode = #tpu.pipeline_mode<synchronous>, transform_indices = @transform_4, window_bounds = array<i64: 1, 128>}, {}, {transform_indices = @transform_6, window_bounds = array<i64: 1, 3, 128>}]} {
    %c24_i32 = arith.constant 24 : i32
    %0 = arith.muli %arg0, %c24_i32 : i32
    %c0_i32 = arith.constant 0 : i32
    %c24_i32_0 = arith.constant 24 : i32
    %1 = arith.addi %c0_i32, %c24_i32_0 : i32
    %c1_i32 = arith.constant 1 : i32
    scf.for %arg11 = %c0_i32 to %1 step %c1_i32  : i32 {
      %c1_i32_29 = arith.constant 1 : i32
      %45 = arith.muli %arg11, %c1_i32_29 : i32
      %c0_i32_30 = arith.constant 0 : i32
      %46 = arith.addi %c0_i32_30, %45 : i32
      %47 = arith.addi %0, %46 : i32
      %48 = arith.index_cast %47 : i32 to index
      %49 = memref.load %arg1[%48] : memref<48xi32, #tpu.memory_space<smem>>
      %c0_i32_31 = arith.constant 0 : i32
      %50 = tpu.memref_slice %arg7[%49, %c0_i32_31] : memref<512x128xf32, #tpu.memory_space<any>> -> memref<1x128xf32, #tpu.memory_space<any>>
      %51 = tpu.memref_squeeze %50 : memref<1x128xf32, #tpu.memory_space<any>> -> memref<128xf32, #tpu.memory_space<any>>
      %c0_i32_32 = arith.constant 0 : i32
      %52 = tpu.memref_slice %arg9[%46, %c0_i32_32] : memref<24x128xf32, #tpu.memory_space<vmem>> -> memref<1x128xf32, #tpu.memory_space<vmem>>
      %53 = tpu.memref_squeeze %52 : memref<1x128xf32, #tpu.memory_space<vmem>> -> memref<128xf32, #tpu.memory_space<vmem>>
      %54 = tpu.memref_slice %arg10[%46] : memref<24x!tpu.dma_semaphore, #tpu.memory_space<semaphore_mem>> -> memref<1x!tpu.dma_semaphore, #tpu.memory_space<semaphore_mem>>
      %55 = tpu.memref_squeeze %54 : memref<1x!tpu.dma_semaphore, #tpu.memory_space<semaphore_mem>> -> memref<!tpu.dma_semaphore, #tpu.memory_space<semaphore_mem>>
      tpu.enqueue_dma source(%51 : memref<128xf32, #tpu.memory_space<any>>) target(%53 : memref<128xf32, #tpu.memory_space<vmem>>) target_semaphore(%55 : memref<!tpu.dma_semaphore, #tpu.memory_space<semaphore_mem>>)
    }
    %c24_i32_1 = arith.constant 24 : i32
    %c0_i32_2 = arith.constant 0 : i32
    %c24_i32_3 = arith.constant 24 : i32
    %2 = arith.addi %c0_i32_2, %c24_i32_3 : i32
    %c1_i32_4 = arith.constant 1 : i32
    scf.for %arg11 = %c0_i32_2 to %2 step %c1_i32_4  : i32 {
      %c1_i32_29 = arith.constant 1 : i32
      %45 = arith.muli %arg11, %c1_i32_29 : i32
      %c0_i32_30 = arith.constant 0 : i32
      %46 = arith.addi %c0_i32_30, %45 : i32
      %c0_i32_31 = arith.constant 0 : i32
      %c0_i32_32 = arith.constant 0 : i32
      %47 = tpu.memref_slice %arg7[%c0_i32_31, %c0_i32_32] : memref<512x128xf32, #tpu.memory_space<any>> -> memref<1x128xf32, #tpu.memory_space<any>>
      %48 = tpu.memref_squeeze %47 : memref<1x128xf32, #tpu.memory_space<any>> -> memref<128xf32, #tpu.memory_space<any>>
      %c0_i32_33 = arith.constant 0 : i32
      %49 = tpu.memref_slice %arg9[%46, %c0_i32_33] : memref<24x128xf32, #tpu.memory_space<vmem>> -> memref<1x128xf32, #tpu.memory_space<vmem>>
      %50 = tpu.memref_squeeze %49 : memref<1x128xf32, #tpu.memory_space<vmem>> -> memref<128xf32, #tpu.memory_space<vmem>>
      %51 = tpu.memref_slice %arg10[%46] : memref<24x!tpu.dma_semaphore, #tpu.memory_space<semaphore_mem>> -> memref<1x!tpu.dma_semaphore, #tpu.memory_space<semaphore_mem>>
      %52 = tpu.memref_squeeze %51 : memref<1x!tpu.dma_semaphore, #tpu.memory_space<semaphore_mem>> -> memref<!tpu.dma_semaphore, #tpu.memory_space<semaphore_mem>>
      tpu.wait_dma2 semaphore(%52 : memref<!tpu.dma_semaphore, #tpu.memory_space<semaphore_mem>>) src(%48 : memref<128xf32, #tpu.memory_space<any>>) dst(%50 : memref<128xf32, #tpu.memory_space<vmem>>)
    }
    %c24_i32_5 = arith.constant 24 : i32
    %c0 = arith.constant 0 : index
    %c0_6 = arith.constant 0 : index
    %3 = vector.load %arg9[%c0, %c0_6] : memref<24x128xf32, #tpu.memory_space<vmem>>, vector<24x128xf32>
    %4 = arith.truncf %3 : vector<24x128xf32> to vector<24x128xbf16>
    %c0_7 = arith.constant 0 : index
    %c0_8 = arith.constant 0 : index
    %5 = vector.load %arg3[%c0_7, %c0_8] : memref<128x256xbf16, #tpu.memory_space<vmem>>, vector<128x256xbf16>
    %cst = arith.constant dense<0.000000e+00> : vector<24x256xf32>
    %6 = tpu.matmul %4, %5, %cst {dimension_numbers = #tpu.dot_dimension_numbers<[1], [0], [0], [1], [0, 0, 1, 1], [], []>} : vector<24x128xbf16>, vector<128x256xbf16>, vector<24x256xf32> -> vector<24x256xf32>
    %c0_9 = arith.constant 0 : index
    %c0_10 = arith.constant 0 : index
    %7 = vector.load %arg4[%c0_9, %c0_10] : memref<1x256xf32, #tpu.memory_space<vmem>>, vector<1x256xf32>
    %8 = vector.broadcast %7 : vector<1x256xf32> to vector<24x256xf32>
    %9 = arith.addf %6, %8 : vector<24x256xf32>
    %10 = arith.mulf %9, %9 : vector<24x256xf32>
    %11 = arith.mulf %9, %10 : vector<24x256xf32>
    %cst_11 = arith.constant 4.471500e-02 : f32
    %12 = vector.broadcast %cst_11 : f32 to vector<24x256xf32>
    %13 = arith.mulf %12, %11 : vector<24x256xf32>
    %14 = arith.addf %9, %13 : vector<24x256xf32>
    %cst_12 = arith.constant 0.797884583 : f32
    %15 = vector.broadcast %cst_12 : f32 to vector<24x256xf32>
    %16 = arith.mulf %15, %14 : vector<24x256xf32>
    %17 = math.tanh %16 : vector<24x256xf32>
    %cst_13 = arith.constant 1.000000e+00 : f32
    %18 = vector.broadcast %cst_13 : f32 to vector<24x256xf32>
    %19 = arith.addf %18, %17 : vector<24x256xf32>
    %cst_14 = arith.constant 5.000000e-01 : f32
    %20 = vector.broadcast %cst_14 : f32 to vector<24x256xf32>
    %21 = arith.mulf %20, %19 : vector<24x256xf32>
    %22 = arith.mulf %9, %21 : vector<24x256xf32>
    %23 = arith.truncf %22 : vector<24x256xf32> to vector<24x256xbf16>
    %c0_15 = arith.constant 0 : index
    %c0_16 = arith.constant 0 : index
    %24 = vector.load %arg5[%c0_15, %c0_16] : memref<256x128xbf16, #tpu.memory_space<vmem>>, vector<256x128xbf16>
    %cst_17 = arith.constant dense<0.000000e+00> : vector<24x128xf32>
    %25 = tpu.matmul %23, %24, %cst_17 {dimension_numbers = #tpu.dot_dimension_numbers<[1], [0], [0], [1], [0, 0, 1, 1], [], []>} : vector<24x256xbf16>, vector<256x128xbf16>, vector<24x128xf32> -> vector<24x128xf32>
    %c0_18 = arith.constant 0 : index
    %c0_19 = arith.constant 0 : index
    %26 = vector.load %arg6[%c0_18, %c0_19] : memref<1x128xf32, #tpu.memory_space<vmem>>, vector<1x128xf32>
    %27 = vector.broadcast %26 : vector<1x128xf32> to vector<24x128xf32>
    %28 = arith.addf %25, %27 : vector<24x128xf32>
    %29 = vector.shape_cast %28 : vector<24x128xf32> to vector<3x8x128xf32>
    %c0_20 = arith.constant 0 : index
    %c0_21 = arith.constant 0 : index
    %c0_22 = arith.constant 0 : index
    %30 = vector.load %arg2[%c0_20, %c0_21, %c0_22] : memref<1x3x8xf32, #tpu.memory_space<vmem>>, vector<1x3x8xf32>
    %31 = vector.shape_cast %30 : vector<1x3x8xf32> to vector<3x8xf32>
    %32 = vector.shape_cast %31 : vector<3x8xf32> to vector<3x8x1xf32>
    %33 = vector.broadcast %32 : vector<3x8x1xf32> to vector<3x8x128xf32>
    %34 = arith.mulf %29, %33 : vector<3x8x128xf32>
    %cst_23 = arith.constant dense<0.000000e+00> : vector<3x128xf32>
    %35 = vector.multi_reduction <add>, %34, %cst_23 [1] : vector<3x8x128xf32> to vector<3x128xf32>
    %cst_24 = arith.constant dense<0.000000e+00> : vector<3xf32>
    %36 = vector.multi_reduction <add>, %31, %cst_24 [1] : vector<3x8xf32> to vector<3xf32>
    %37 = vector.shape_cast %36 : vector<3xf32> to vector<3x1xf32>
    %cst_25 = arith.constant 9.99999971E-10 : f32
    %38 = vector.broadcast %cst_25 : f32 to vector<3x1xf32>
    %39 = arith.maximumf %37, %38 : vector<3x1xf32>
    %40 = vector.broadcast %39 : vector<3x1xf32> to vector<3x128xf32>
    %41 = arith.divf %35, %40 : vector<3x128xf32>
    %c0_26 = arith.constant 0 : index
    %c0_27 = arith.constant 0 : index
    %c0_28 = arith.constant 0 : index
    %42 = vector.load %arg8[%c0_26, %c0_27, %c0_28] : memref<1x3x128xf32, #tpu.memory_space<vmem>>, vector<1x3x128xf32>
    %43 = vector.shape_cast %42 : vector<1x3x128xf32> to vector<3x128xf32>
    %44 = vector.shape_cast %41 : vector<3x128xf32> to vector<1x3x128xf32>
    tpu.vector_store %arg8[%c0_26, %c0_27, %c0_28], %44 {strides = array<i32>} : memref<1x3x128xf32, #tpu.memory_space<vmem>>, vector<1x3x128xf32>,
    return
  }
  func.func @transform_0(%arg0: i32, %arg1: memref<48xi32, #tpu.memory_space<smem>>) -> (i32, i32, i32) {
    %c0_i32 = arith.constant 0 : i32
    %c0_i32_0 = arith.constant 0 : i32
    %c0_i32_1 = arith.constant 0 : i32
    return %arg0, %c0_i32, %c0_i32_0 : i32, i32, i32
  }
  func.func @transform_1(%arg0: i32, %arg1: memref<48xi32, #tpu.memory_space<smem>>) -> (i32, i32) {
    %c0_i32 = arith.constant 0 : i32
    %c0_i32_0 = arith.constant 0 : i32
    %c0_i32_1 = arith.constant 0 : i32
    return %c0_i32, %c0_i32_0 : i32, i32
  }
  func.func @transform_2(%arg0: i32, %arg1: memref<48xi32, #tpu.memory_space<smem>>) -> (i32, i32) {
    %c0_i32 = arith.constant 0 : i32
    %c0_i32_0 = arith.constant 0 : i32
    %c0_i32_1 = arith.constant 0 : i32
    return %c0_i32, %c0_i32_0 : i32, i32
  }
  func.func @transform_3(%arg0: i32, %arg1: memref<48xi32, #tpu.memory_space<smem>>) -> (i32, i32) {
    %c0_i32 = arith.constant 0 : i32
    %c0_i32_0 = arith.constant 0 : i32
    %c0_i32_1 = arith.constant 0 : i32
    return %c0_i32, %c0_i32_0 : i32, i32
  }
  func.func @transform_4(%arg0: i32, %arg1: memref<48xi32, #tpu.memory_space<smem>>) -> (i32, i32) {
    %c0_i32 = arith.constant 0 : i32
    %c0_i32_0 = arith.constant 0 : i32
    %c0_i32_1 = arith.constant 0 : i32
    return %c0_i32, %c0_i32_0 : i32, i32
  }
  func.func @transform_6(%arg0: i32, %arg1: memref<48xi32, #tpu.memory_space<smem>>) -> (i32, i32, i32) {
    %c0_i32 = arith.constant 0 : i32
    %c0_i32_0 = arith.constant 0 : i32
    %c0_i32_1 = arith.constant 0 : i32
    return %arg0, %c0_i32, %c0_i32_0 : i32, i32, i32
  }
}

</mosaic_0001>

<llo_original>
// kernel: tpu_custom_call.1
$region0: #{tpu_custom_call.1}
  #allocation0 [shape = 'u32[]', space=smem, size = 0x4, offset = 0x4, fixed_abs, tag = 'smem constant byte address 0x4 - core index']
  #allocation1 [shape = 'u32[144,128]{1,0:T(1,128)}', space=vmem, size = 0x12000, scoped, tag = 'internal scratch']
  #allocation2 [shape = 'f32[24,128]{1,0:T(8,128)}', space=vmem, size = 0x3000, scoped, tag = 'scratch operand']
  #allocation3 [shape = 's32[24]{0}', space=sflag, size = 0x60, scoped, tag = 'scratch operand']
  #allocation4 [shape = 's32[1]{0}', space=sflag, size = 0x4, scoped, tag = 'scoped memory for tpu_custom_call.1']
  #allocation5 [shape = 'u8[512]{0}', space=smem, size = 0x200, scoped, tag = 'prefetched SMEM operand 0']
  #allocation10 [shape = 's32[]', space=sflag, size = 0x4, offset = 0, fixed_abs, tag = 'sflag constant byte address 0x0 - dummy sync flag']
  #allocation11 [shape = 's32[]', space=sflag, size = 0x4, offset = 0, fixed_abs, tag = 'sflag constant byte address 0x0 - dummy sync flag']
  #allocation12 [shape = 'u32[]', space=smem, size = 0x4, offset = 0x44, fixed_abs, tag = 'smem constant byte address 0x44 - assertion arg 0']
  #allocation13 [shape = 'u32[]', space=smem, size = 0x4, offset = 0x48, fixed_abs, tag = 'smem constant byte address 0x48 - assertion arg 1']
  %s0 = inlined_call_operand.vmem [shape: s32[48], index: 0, kind: input, shape index: {}]
  %s1 = inlined_call_operand.vmem [shape: f32[2,3,8], index: 1, kind: input, shape index: {}]
  %s2 = inlined_call_operand.hbm [shape: bf16[128,256], index: 2, kind: input, shape index: {}]
  %s3 = inlined_call_operand.vmem [shape: f32[1,256], index: 3, kind: input, shape index: {}]
  %s4 = inlined_call_operand.hbm [shape: bf16[256,128], index: 4, kind: input, shape index: {}]
  %s5 = inlined_call_operand.vmem [shape: f32[1,128], index: 5, kind: input, shape index: {}]
  %s6 = inlined_call_operand.hbm [shape: f32[512,128], index: 6, kind: input, shape index: {}]
  %s7 = inlined_call_operand.vmem [shape: f32[2,3,128], index: 7, kind: output, shape index: {}]
  %s8 = sld [smem:[#allocation0]]
  $region79: #{tpu_custom_call.1} parent=0
    _
  %s10 = ssub.s32 1, %s8
  %s11 = scalar_select 0, %s10, %s8
  %s12 = sshll.u32 %s0, 4
  %s13 = int_to_ptr.vmem [resolvable:$true] %s12
  %15 = dma.vmem_to_smem %s13, 16, [#allocation5], [#allocation4]
  %16 = dma.done [#allocation4], 16
  %17 = sfence
  $region1: #{tpu_custom_call.1} parent=0
    #allocation6 [shape = 'u8[65536]{0}', space=vmem, size = 0x10000, scoped, tag = 'input window, operand 2, single buffered']
    #allocation7 [shape = 's32[2]{0}', space=sflag, size = 0x8, scoped, tag = 'scoped memory for tpu_custom_call.1']
    #allocation8 [shape = 'u8[65536]{0}', space=vmem, size = 0x10000, scoped, tag = 'input window, operand 4, single buffered']
    #allocation9 [shape = 's32[1]{0}', space=sflag, size = 0x4, scoped, tag = 'scoped memory for tpu_custom_call.1']
    %18 = vsyncpa [#allocation7], 0
    %19 = vsyncpa [#allocation9], 0
    loop: start=0, step=1, limit=4
    $region2: #{tpu_custom_call.1} parent=1 // loop_pre_header
      _
    $region3: #{tpu_custom_call.1} parent=1 // loop_header
      %s21 = sphi 0, %s25
      %p22 = scmp.ge.s32.totalorder %s21, 4
      %s31 = sphi 0, %s33
      %s34 = sphi 0, %s31
      %s35 = sphi 0, %s34
      %s51 = sphi 0, %s35
      %s55 = sphi 0, %s55
      %s57 = sphi 0, %s55
      %s58 = sphi 0, %s57
      %s72 = sphi 0, %s58
      %s76 = sphi 0, %s76
      %s78 = sphi 0, %s76
      %s79 = sphi 0, %s78
      %s93 = sphi 0, %s79
      %s97 = sphi 0, %s97
      %s99 = sphi 0, %s97
      %s100 = sphi 0, %s99
      %s114 = sphi 0, %s100
      %s118 = sphi 0, %s118
      %s120 = sphi 0, %s118
      %s121 = sphi 0, %s120
      %s135 = sphi 0, %s121
      %s141 = sphi 0, %s143
      %s144 = sphi 0, %s141
      %s145 = sphi 0, %s144
      %s161 = sphi 0, %s145
    $region4: #{tpu_custom_call.1} parent=1 // loop_header_branch
      %24 = sbr.rel (%p22) target = $region8
    $region5: #{tpu_custom_call.1} parent=1 // loop_body
      %s26 = ssub.s32 %s21, 1
      %s27 = ssub.s32 %s21, 2
      %s28 = sadd.s32 %s21, 1
      %s29 = ssub.s32 %s21, %s28
      %p30 = scmp.eq.s32.totalorder %s29, 0
      %s32 = sadd.s32 %s31, 1
      %s33 = scalar_select %p30, %s31, %s32
      %p36 = pneg %p30
      %p37 = scmp.eq.s32.totalorder %s21, 1
      %p38 = por %p36, %p37
      %p39 = scmp.ne.s32.totalorder %s31, %s34
      %p40 = scmp.eq.s32.totalorder %s21, 0
      %p41 = por %p39, %p40
      %p42 = scmp.ne.s32.totalorder %s31, %s34
      %p43 = scmp.eq.s32.totalorder %s26, 1
      %p44 = por %p42, %p43
      %p45 = scmp.ne.s32.totalorder %s34, %s35
      %p46 = scmp.eq.s32.totalorder %s26, 0
      %p47 = por %p45, %p46
      %p48 = scmp.ne.s32.totalorder %s34, %s35
      %p49 = scmp.eq.s32.totalorder %s27, 1
      %p50 = por %p48, %p49
      %p52 = scmp.ne.s32.totalorder %s35, %s51
      %p53 = scmp.eq.s32.totalorder %s27, 0
      %p54 = por %p52, %p53
      %s56 = sadd.s32 %s55, 1
      %p59 = scmp.eq.s32.totalorder %s21, 1
      %p60 = scmp.ne.s32.totalorder %s55, %s57
      %p61 = scmp.eq.s32.totalorder %s21, 0
      %p62 = por %p60, %p61
      %p63 = scmp.ne.s32.totalorder %s55, %s57
      %p64 = scmp.eq.s32.totalorder %s26, 1
      %p65 = por %p63, %p64
      %p66 = scmp.ne.s32.totalorder %s57, %s58
      %p67 = scmp.eq.s32.totalorder %s26, 0
      %p68 = por %p66, %p67
      %p69 = scmp.ne.s32.totalorder %s57, %s58
      %p70 = scmp.eq.s32.totalorder %s27, 1
      %p71 = por %p69, %p70
      %p73 = scmp.ne.s32.totalorder %s58, %s72
      %p74 = scmp.eq.s32.totalorder %s27, 0
      %p75 = por %p73, %p74
      %s77 = sadd.s32 %s76, 1
      %p80 = scmp.eq.s32.totalorder %s21, 1
      %p81 = scmp.ne.s32.totalorder %s76, %s78
      %p82 = scmp.eq.s32.totalorder %s21, 0
      %p83 = por %p81, %p82
      %p84 = scmp.ne.s32.totalorder %s76, %s78
      %p85 = scmp.eq.s32.totalorder %s26, 1
      %p86 = por %p84, %p85
      %p87 = scmp.ne.s32.totalorder %s78, %s79
      %p88 = scmp.eq.s32.totalorder %s26, 0
      %p89 = por %p87, %p88
      %p90 = scmp.ne.s32.totalorder %s78, %s79
      %p91 = scmp.eq.s32.totalorder %s27, 1
      %p92 = por %p90, %p91
      %p94 = scmp.ne.s32.totalorder %s79, %s93
      %p95 = scmp.eq.s32.totalorder %s27, 0
      %p96 = por %p94, %p95
      %s98 = sadd.s32 %s97, 1
      %p101 = scmp.eq.s32.totalorder %s21, 1
      %p102 = scmp.ne.s32.totalorder %s97, %s99
      %p103 = scmp.eq.s32.totalorder %s21, 0
      %p104 = por %p102, %p103
      %p105 = scmp.ne.s32.totalorder %s97, %s99
      %p106 = scmp.eq.s32.totalorder %s26, 1
      %p107 = por %p105, %p106
      %p108 = scmp.ne.s32.totalorder %s99, %s100
      %p109 = scmp.eq.s32.totalorder %s26, 0
      %p110 = por %p108, %p109
      %p111 = scmp.ne.s32.totalorder %s99, %s100
      %p112 = scmp.eq.s32.totalorder %s27, 1
      %p113 = por %p111, %p112
      %p115 = scmp.ne.s32.totalorder %s100, %s114
      %p116 = scmp.eq.s32.totalorder %s27, 0
      %p117 = por %p115, %p116
      %s119 = sadd.s32 %s118, 1
      %p122 = scmp.eq.s32.totalorder %s21, 1
      %p123 = scmp.ne.s32.totalorder %s118, %s120
      %p124 = scmp.eq.s32.totalorder %s21, 0
      %p125 = por %p123, %p124
      %p126 = scmp.ne.s32.totalorder %s118, %s120
      %p127 = scmp.eq.s32.totalorder %s26, 1
      %p128 = por %p126, %p127
      %p129 = scmp.ne.s32.totalorder %s120, %s121
      %p130 = scmp.eq.s32.totalorder %s26, 0
      %p131 = por %p129, %p130
      %p132 = scmp.ne.s32.totalorder %s120, %s121
      %p133 = scmp.eq.s32.totalorder %s27, 1
      %p134 = por %p132, %p133
      %p136 = scmp.ne.s32.totalorder %s121, %s135
      %p137 = scmp.eq.s32.totalorder %s27, 0
      %p138 = por %p136, %p137
      %s139 = ssub.s32 %s21, %s28
      %p140 = scmp.eq.s32.totalorder %s139, 0
      %s142 = sadd.s32 %s141, 1
      %s143 = scalar_select %p140, %s141, %s142
      %p146 = pneg %p140
      %p147 = scmp.eq.s32.totalorder %s21, 1
      %p148 = por %p146, %p147
      %p149 = scmp.ne.s32.totalorder %s141, %s144
      %p150 = scmp.eq.s32.totalorder %s21, 0
      %p151 = por %p149, %p150
      %p152 = scmp.ne.s32.totalorder %s141, %s144
      %p153 = scmp.eq.s32.totalorder %s26, 1
      %p154 = por %p152, %p153
      %p155 = scmp.ne.s32.totalorder %s144, %s145
      %p156 = scmp.eq.s32.totalorder %s26, 0
      %p157 = por %p155, %p156
      %p158 = scmp.ne.s32.totalorder %s144, %s145
      %p159 = scmp.eq.s32.totalorder %s27, 1
      %p160 = por %p158, %p159
      %p162 = scmp.ne.s32.totalorder %s145, %s161
      %p163 = scmp.eq.s32.totalorder %s27, 0
      %p164 = por %p162, %p163
      %p165 = scmp.le.s32.totalorder 1, %s21
      %p166 = scmp.lt.s32.totalorder %s21, 3
      %p167 = pnand %p165, %p166
      %p168 = pneg %p167
      // Predicated region
      $region9: #{tpu_custom_call.1} parent=5 // pred_check
        _
      $region10: #{tpu_custom_call.1} parent=5 // pred_check_branch
        %170 = sbr.rel (%p167) target = $region12
      $region11: #{tpu_custom_call.1} parent=5 // pred_region
        %s171 = ssub.s32 %s21, 1
        // Predicated region
        $region13: #{tpu_custom_call.1} parent=11 // pred_check
          %p172 = pneg %p68
        $region14: #{tpu_custom_call.1} parent=11 // pred_check_branch
          %174 = sbr.rel (%p172) target = $region16
        $region15: #{tpu_custom_call.1} parent=11 // pred_region
          %s176 = ssub.s32 2048, 2048
          %177 = vsyncadd [#allocation7], %s176
          %s178 = sshll.u32 [#allocation6], 4
          %s179 = int_to_ptr.vmem [resolvable:$true] %s178
          %184 = dma.hbm_to_vmem [thread:$0]  %s2, 2048, %s179, [#allocation7], 128, 128, 8
        $region16: #{tpu_custom_call.1} parent=11 // pred_fallthru
          _
        // Predicated region
        $region17: #{tpu_custom_call.1} parent=11 // pred_check
          %p185 = pneg %p89
        $region18: #{tpu_custom_call.1} parent=11 // pred_check_branch
          %187 = sbr.rel (%p185) target = $region20
        $region19: #{tpu_custom_call.1} parent=11 // pred_region
          _
        $region20: #{tpu_custom_call.1} parent=11 // pred_fallthru
          _
        // Predicated region
        $region21: #{tpu_custom_call.1} parent=11 // pred_check
          %p188 = pneg %p110
        $region22: #{tpu_custom_call.1} parent=11 // pred_check_branch
          %190 = sbr.rel (%p188) target = $region24
        $region23: #{tpu_custom_call.1} parent=11 // pred_region
          %s192 = ssub.s32 2048, 2048
          %193 = vsyncadd [#allocation9], %s192
          %s194 = sshll.u32 [#allocation8], 4
          %s195 = int_to_ptr.vmem [resolvable:$true] %s194
          %200 = dma.hbm_to_vmem [thread:$0]  %s4, 2048, %s195, [#allocation9], 64, 64, 4
        $region24: #{tpu_custom_call.1} parent=11 // pred_fallthru
          _
        // Predicated region
        $region25: #{tpu_custom_call.1} parent=11 // pred_check
          %p201 = pneg %p131
        $region26: #{tpu_custom_call.1} parent=11 // pred_check_branch
          %203 = sbr.rel (%p201) target = $region28
        $region27: #{tpu_custom_call.1} parent=11 // pred_region
          _
        $region28: #{tpu_custom_call.1} parent=11 // pred_fallthru
          _
      $region12: #{tpu_custom_call.1} parent=5 // pred_fallthru
        _
      %p204 = scmp.lt.s32.totalorder %s21, 2
      // Predicated region
      $region29: #{tpu_custom_call.1} parent=5 // pred_check
        %p205 = pneg %p204
      $region30: #{tpu_custom_call.1} parent=5 // pred_check_branch
        %207 = sbr.rel (%p205) target = $region32
      $region31: #{tpu_custom_call.1} parent=5 // pred_region
        // Predicated region
        $region33: #{tpu_custom_call.1} parent=31 // pred_check
          %p208 = pneg %p41
        $region34: #{tpu_custom_call.1} parent=31 // pred_check_branch
          %210 = sbr.rel (%p208) target = $region36
        $region35: #{tpu_custom_call.1} parent=31 // pred_region
          %p211 = scmp.lt.s32.totalorder %s21, 1
          %s212 = scalar_select %p211, %s21, 1
          %s213 = smul.addr %s212, 4
          %s214 = scalar_lea.vmem %s1, %s213
        $region36: #{tpu_custom_call.1} parent=31 // pred_fallthru
          _
      $region32: #{tpu_custom_call.1} parent=5 // pred_fallthru
        _
      %p215 = scmp.le.s32.totalorder 1, %s21
      %p216 = scmp.lt.s32.totalorder %s21, 3
      %p217 = pnand %p215, %p216
      %p218 = pneg %p217
      // Predicated region
      $region37: #{tpu_custom_call.1} parent=5 // pred_check
        _
      $region38: #{tpu_custom_call.1} parent=5 // pred_check_branch
        %220 = sbr.rel (%p217) target = $region40
      $region39: #{tpu_custom_call.1} parent=5 // pred_region
        %s221 = ssub.s32 %s21, 1
        // Predicated region
        $region41: #{tpu_custom_call.1} parent=39 // pred_check
          %p222 = pneg %p68
        $region42: #{tpu_custom_call.1} parent=39 // pred_check_branch
          %224 = sbr.rel (%p222) target = $region44
        $region43: #{tpu_custom_call.1} parent=39 // pred_region
          %225 = dma.done [#allocation7], 2048
        $region44: #{tpu_custom_call.1} parent=39 // pred_fallthru
          _
        // Predicated region
        $region45: #{tpu_custom_call.1} parent=39 // pred_check
          %p226 = pneg %p110
        $region46: #{tpu_custom_call.1} parent=39 // pred_check_branch
          %228 = sbr.rel (%p226) target = $region48
        $region47: #{tpu_custom_call.1} parent=39 // pred_region
          %229 = dma.done [#allocation9], 2048
        $region48: #{tpu_custom_call.1} parent=39 // pred_fallthru
          _
        %p230 = scmp.lt.s32.totalorder %s26, 1
        %s231 = scalar_select %p230, %s26, 1
        %s232 = smul.addr %s231, 4
        %s233 = scalar_lea.vmem %s1, %s232
        %p234 = pneg %p47
        %p235 = pneg %p44
        %p236 = pneg %p68
        %p237 = pneg %p65
        %p238 = pneg %p89
        %p239 = pneg %p86
        %p240 = pneg %p110
        %p241 = pneg %p107
        %p242 = pneg %p131
        %p243 = pneg %p128
        %p244 = pneg %p157
        %p245 = pneg %p154
        %p246 = scmp.lt.s32.totalorder %s26, 1
        %s247 = scalar_select %p246, %s26, 1
        %s248 = smul.addr %s247, 4
        %s249 = scalar_lea.vmem %s7, %s248
        %p250 = scmp.lt.s32.totalorder %s26, 1
        %s251 = scalar_select %p250, %s26, 1
        %s252 = smul.addr %s251, 4
        %s253 = scalar_lea.vmem %s1, %s252
        %p254 = scmp.lt.s32.totalorder %s26, 1
        %s255 = scalar_select %p254, %s26, 1
        %s256 = smul.addr %s255, 4
        %s257 = scalar_lea.vmem %s7, %s256
        %s259 = smul.u32 %s26, 24
        loop: start=0, step=1, limit=24
        $region49: #{tpu_custom_call.1} parent=39 // loop_pre_header
          _
        $region50: #{tpu_custom_call.1} parent=39 // loop_header
          %s261 = sphi 0, %s265
          %p262 = scmp.ge.s32.totalorder %s261, 24
        $region51: #{tpu_custom_call.1} parent=39 // loop_header_branch
          %264 = sbr.rel (%p262) target = $region55
        $region52: #{tpu_custom_call.1} parent=39 // loop_body
          %s266 = sadd.s32 %s259, %s261
          %s267 = sld [smem:[#allocation5 + %s266]]
          %s268 = smul.addr %s267, 16
          %s269 = scalar_lea.hbm %s6, %s268
          %s270 = scalar_lea.vmem [#allocation2], %s261
          %s271 = scalar_lea.sflag [#allocation3], %s261
          // Predicated region
          $region56: #{tpu_custom_call.1} parent=52 // pred_check
            _
          $region57: #{tpu_custom_call.1} parent=52 // pred_check_branch
            %273 = sbr.rel target = $region59
          $region58: #{tpu_custom_call.1} parent=52 // pred_region
            %274 = sst [smem:[#allocation12]] [#allocation11]
            %275 = sst [smem:[#allocation13]] [#allocation10]
          $region59: #{tpu_custom_call.1} parent=52 // pred_fallthru
            _
          %277 = shalt.err (0)
          %s279 = sshll.u32 %s270, 4
          %s280 = int_to_ptr.vmem [resolvable:$true] %s279
          %282 = dma.hbm_to_vmem [thread:$0]  %s269, 16, %s280, %s271
        $region53: #{tpu_custom_call.1} parent=39 // loop_footer
          %s265 = sadd.s32 1, %s261
        $region54: #{tpu_custom_call.1} parent=39 // loop_footer_branch
          %260 = sbr.rel target = $region50
        $region55: #{tpu_custom_call.1} parent=39 // loop_exit
          _
        loop: start=0, step=1, limit=24
        $region60: #{tpu_custom_call.1} parent=39 // loop_pre_header
          _
        $region61: #{tpu_custom_call.1} parent=39 // loop_header
          %s284 = sphi 0, %s288
          %p285 = scmp.ge.s32.totalorder %s284, 24
        $region62: #{tpu_custom_call.1} parent=39 // loop_header_branch
          %287 = sbr.rel (%p285) target = $region66
        $region63: #{tpu_custom_call.1} parent=39 // loop_body
          %s289 = scalar_lea.sflag [#allocation3], %s284
          %291 = dma.done %s289, 16
        $region64: #{tpu_custom_call.1} parent=39 // loop_footer
          %s288 = sadd.s32 1, %s284
        $region65: #{tpu_custom_call.1} parent=39 // loop_footer_branch
          %283 = sbr.rel target = $region61
        $region66: #{tpu_custom_call.1} parent=39 // loop_exit
          _
        %v292 = vld [vmem:[#allocation2] sm:$0xff]
        %v293 = vld [vmem:[#allocation2 + $0x8] sm:$0xff]
        %v294 = vld [vmem:[#allocation2 + $0x10] sm:$0xff]
        %v295 = vpack.c.bf16 %v293, %v292
        %v296 = vpack.c.bf16 %v294, %v294
        %v297 = vld [vmem:[#allocation6] sm:$0xff]
        %v298 = vld [vmem:[#allocation6 + $0x8] sm:$0xff]
        %v299 = vld [vmem:[#allocation6 + $0x10] sm:$0xff]
        %v300 = vld [vmem:[#allocation6 + $0x18] sm:$0xff]
        %v301 = vld [vmem:[#allocation6 + $0x20] sm:$0xff]
        %v302 = vld [vmem:[#allocation6 + $0x28] sm:$0xff]
        %v303 = vld [vmem:[#allocation6 + $0x30] sm:$0xff]
        %v304 = vld [vmem:[#allocation6 + $0x38] sm:$0xff]
        %v305 = vld [vmem:[#allocation6 + $0x40] sm:$0xff]
        %v306 = vld [vmem:[#allocation6 + $0x48] sm:$0xff]
        %v307 = vld [vmem:[#allocation6 + $0x50] sm:$0xff]
        %v308 = vld [vmem:[#allocation6 + $0x58] sm:$0xff]
        %v309 = vld [vmem:[#allocation6 + $0x60] sm:$0xff]
        %v310 = vld [vmem:[#allocation6 + $0x68] sm:$0xff]
        %v311 = vld [vmem:[#allocation6 + $0x70] sm:$0xff]
        %v312 = vld [vmem:[#allocation6 + $0x78] sm:$0xff]
        %v313 = vld [vmem:[%s3] sm:$0x3]
        %v315 = vlaneseq
        %v316 = vshrl.u32 %v315, 7
        %v317 = vsub.s32 0, %v316
        %v318 = vrot.slane %v313, %v317
        %v319 = vlaneseq
        %v320 = vshrl.u32 %v319, 7
        %v321 = vsub.s32 1, %v320
        %v322 = vrot.slane %v313, %v321
        %v341 = vunpack.c.l.b16 %v297
        %v342 = vunpack.c.h.b16 %v297
        %v343 = vunpack.c.l.b16 %v298
        %v344 = vunpack.c.h.b16 %v298
        %v345 = vunpack.c.l.b16 %v299
        %v346 = vunpack.c.h.b16 %v299
        %v347 = vunpack.c.l.b16 %v300
        %v348 = vunpack.c.h.b16 %v300
        %v349 = vunpack.c.l.b16 %v301
        %v350 = vunpack.c.h.b16 %v301
        %v351 = vunpack.c.l.b16 %v302
        %v352 = vunpack.c.h.b16 %v302
        %v353 = vunpack.c.l.b16 %v303
        %v354 = vunpack.c.h.b16 %v303
        %v355 = vunpack.c.l.b16 %v304
        %v356 = vunpack.c.h.b16 %v304
        %v357 = vunpack.c.l.b16 %v305
        %v358 = vunpack.c.h.b16 %v305
        %v359 = vunpack.c.l.b16 %v306
        %v360 = vunpack.c.h.b16 %v306
        %v361 = vunpack.c.l.b16 %v307
        %v362 = vunpack.c.h.b16 %v307
        %v363 = vunpack.c.l.b16 %v308
        %v364 = vunpack.c.h.b16 %v308
        %v365 = vunpack.c.l.b16 %v309
        %v366 = vunpack.c.h.b16 %v309
        %v367 = vunpack.c.l.b16 %v310
        %v368 = vunpack.c.h.b16 %v310
        %v369 = vunpack.c.l.b16 %v311
        %v370 = vunpack.c.h.b16 %v311
        %v371 = vunpack.c.l.b16 %v312
        %v372 = vunpack.c.h.b16 %v312
        %v373 = vpack.c.b16 %v343, %v341
        %v374 = vpack.c.b16 %v344, %v342
        %v375 = vpack.c.b16 %v347, %v345
        %v376 = vpack.c.b16 %v348, %v346
        %v377 = vpack.c.b16 %v351, %v349
        %v378 = vpack.c.b16 %v352, %v350
        %v379 = vpack.c.b16 %v355, %v353
        %v380 = vpack.c.b16 %v356, %v354
        %v381 = vpack.c.b16 %v359, %v357
        %v382 = vpack.c.b16 %v360, %v358
        %v383 = vpack.c.b16 %v363, %v361
        %v384 = vpack.c.b16 %v364, %v362
        %v385 = vpack.c.b16 %v367, %v365
        %v386 = vpack.c.b16 %v368, %v366
        %v387 = vpack.c.b16 %v371, %v369
        %v388 = vpack.c.b16 %v372, %v370
        %405 = vmatprep.subr.bf16.mxu0 %v374
        %406 = vmatpush1.bf16.msra.mxu0 %v373
        %407 = vmatprep.subr.bf16.mxu0 %v376
        %408 = vmatpush1.bf16.msra.mxu0 %v375
        %409 = vmatprep.subr.bf16.mxu0 %v378
        %410 = vmatpush1.bf16.msra.mxu0 %v377
        %411 = vmatprep.subr.bf16.mxu0 %v380
        %412 = vmatpush1.bf16.msra.mxu0 %v379
        %413 = vmatprep.subr.bf16.mxu0 %v382
        %414 = vmatpush1.bf16.msra.mxu0 %v381
        %415 = vmatprep.subr.bf16.mxu0 %v384
        %416 = vmatpush1.bf16.msra.mxu0 %v383
        %417 = vmatprep.subr.bf16.mxu0 %v386
        %418 = vmatpush1.bf16.msra.mxu0 %v385
        %419 = vmatprep.subr.bf16.mxu0 %v388
        %420 = vmatpush1.bf16.msra.mxu0 %v387
        %421 = vmatprep.subr.bf16.mxu0 0
        %422 = vmatpush1.bf16.msra.mxu0 0
        %423 = vmatprep.subr.bf16.mxu0 0
        %424 = vmatpush1.bf16.msra.mxu0 0
        %425 = vmatprep.subr.bf16.mxu0 0
        %426 = vmatpush1.bf16.msra.mxu0 0
        %427 = vmatprep.subr.bf16.mxu0 0
        %428 = vmatpush1.bf16.msra.mxu0 0
        %429 = vmatprep.subr.bf16.mxu0 0
        %430 = vmatpush1.bf16.msra.mxu0 0
        %431 = vmatprep.subr.bf16.mxu0 0
        %432 = vmatpush1.bf16.msra.mxu0 0
        %433 = vmatprep.subr.bf16.mxu0 0
        %434 = vmatpush1.bf16.msra.mxu0 0
        %435 = vmatprep.subr.bf16.mxu0 0
        %436 = vmatpush1.bf16.msra.mxu0 0
        %437 = vmatprep.mubr.bf16.mxu0 0
        %438 = vmatmul.mubr.bf16.gmra.mrb[0].mxu0 %v295
        %v439 = vpop.f32.mrb[0].mxu0
        %v440 = vadd.f32 %v318, %v439
        %v441 = vpop.f32.mrb[0].mxu0
        %v442 = vadd.f32 %v322, %v441
        %v443 = vpop.f32.mrb[0].mxu0
        %v444 = vadd.f32 %v318, %v443
        %v445 = vpop.f32.mrb[0].mxu0
        %v446 = vadd.f32 %v322, %v445
        %447 = vmatprep.mubr.bf16.mxu0 0
        %448 = vmatmul.mubr.bf16.gmra.mrb[0].mxu0 %v296
        %v449 = vpop.f32.mrb[0].mxu0
        %v450 = vadd.f32 %v318, %v449
        %v451 = vpop.f32.mrb[0].mxu0
        %v452 = vadd.f32 %v322, %v451
        %v453 = vpop.f32.mrb[0].mxu0
        %v454 = vpop.f32.mrb[0].mxu0
        %455 = vdwg.mxu0
        %v456 = vmul.f32 %v440, %v440
        %v457 = vmul.f32 %v442, %v442
        %v458 = vmul.f32 %v444, %v444
        %v459 = vmul.f32 %v446, %v446
        %v460 = vmul.f32 %v450, %v450
        %v461 = vmul.f32 %v452, %v452
        %v462 = vmul.f32 %v440, %v456
        %v463 = vmul.f32 %v442, %v457
        %v464 = vmul.f32 %v444, %v458
        %v465 = vmul.f32 %v446, %v459
        %v466 = vmul.f32 %v450, %v460
        %v467 = vmul.f32 %v452, %v461
        %v468 = vmul.f32 %v462, 0.044715
        %v469 = vmul.f32 %v463, 0.044715
        %v470 = vmul.f32 %v464, 0.044715
        %v471 = vmul.f32 %v465, 0.044715
        %v472 = vmul.f32 %v466, 0.044715
        %v473 = vmul.f32 %v467, 0.044715
        %v474 = vadd.f32 %v440, %v468
        %v475 = vadd.f32 %v442, %v469
        %v476 = vadd.f32 %v444, %v470
        %v477 = vadd.f32 %v446, %v471
        %v478 = vadd.f32 %v450, %v472
        %v479 = vadd.f32 %v452, %v473
        %v480 = vmul.f32 %v474, 0.7978846
        %v481 = vmul.f32 %v475, 0.7978846
        %v482 = vmul.f32 %v476, 0.7978846
        %v483 = vmul.f32 %v477, 0.7978846
        %v484 = vmul.f32 %v478, 0.7978846
        %v485 = vmul.f32 %v479, 0.7978846
        %v486 = vtanh.pop %v480
        %v487 = vtanh.pop %v481
        %v488 = vtanh.pop %v482
        %v489 = vtanh.pop %v483
        %v490 = vtanh.pop %v484
        %v491 = vtanh.pop %v485
        %v492 = vadd.f32 %v486, 1.0
        %v493 = vadd.f32 %v487, 1.0
        %v494 = vadd.f32 %v488, 1.0
        %v495 = vadd.f32 %v489, 1.0
        %v496 = vadd.f32 %v490, 1.0
        %v497 = vadd.f32 %v491, 1.0
        %v498 = vmul.f32 %v492, 0.5
        %v499 = vmul.f32 %v493, 0.5
        %v500 = vmul.f32 %v494, 0.5
        %v501 = vmul.f32 %v495, 0.5
        %v502 = vmul.f32 %v496, 0.5
        %v503 = vmul.f32 %v497, 0.5
        %v504 = vmul.f32 %v440, %v498
        %v505 = vmul.f32 %v442, %v499
        %v506 = vmul.f32 %v444, %v500
        %v507 = vmul.f32 %v446, %v501
        %v508 = vmul.f32 %v450, %v502
        %v509 = vmul.f32 %v452, %v503
        %v510 = vpack.c.bf16 %v506, %v504
        %v511 = vpack.c.bf16 %v507, %v505
        %v512 = vpack.c.bf16 %v508, %v508
        %v513 = vpack.c.bf16 %v509, %v509
        %v514 = vld [vmem:[#allocation8] sm:$0xf]
        %v515 = vld [vmem:[#allocation8 + $0x4] sm:$0xf]
        %v516 = vld [vmem:[#allocation8 + $0x8] sm:$0xf]
        %v517 = vld [vmem:[#allocation8 + $0xc] sm:$0xf]
        %v518 = vld [vmem:[#allocation8 + $0x10] sm:$0xf]
        %v519 = vld [vmem:[#allocation8 + $0x14] sm:$0xf]
        %v520 = vld [vmem:[#allocation8 + $0x18] sm:$0xf]
        %v521 = vld [vmem:[#allocation8 + $0x1c] sm:$0xf]
        %v522 = vld [vmem:[#allocation8 + $0x20] sm:$0xf]
        %v523 = vld [vmem:[#allocation8 + $0x24] sm:$0xf]
        %v524 = vld [vmem:[#allocation8 + $0x28] sm:$0xf]
        %v525 = vld [vmem:[#allocation8 + $0x2c] sm:$0xf]
        %v526 = vld [vmem:[#allocation8 + $0x30] sm:$0xf]
        %v527 = vld [vmem:[#allocation8 + $0x34] sm:$0xf]
        %v528 = vld [vmem:[#allocation8 + $0x38] sm:$0xf]
        %v529 = vld [vmem:[#allocation8 + $0x3c] sm:$0xf]
        %v530 = vld [vmem:[#allocation8 + $0x40] sm:$0xf]
        %v531 = vld [vmem:[#allocation8 + $0x44] sm:$0xf]
        %v532 = vld [vmem:[#allocation8 + $0x48] sm:$0xf]
        %v533 = vld [vmem:[#allocation8 + $0x4c] sm:$0xf]
        %v534 = vld [vmem:[#allocation8 + $0x50] sm:$0xf]
        %v535 = vld [vmem:[#allocation8 + $0x54] sm:$0xf]
        %v536 = vld [vmem:[#allocation8 + $0x58] sm:$0xf]
        %v537 = vld [vmem:[#allocation8 + $0x5c] sm:$0xf]
        %v538 = vld [vmem:[#allocation8 + $0x60] sm:$0xf]
        %v539 = vld [vmem:[#allocation8 + $0x64] sm:$0xf]
        %v540 = vld [vmem:[#allocation8 + $0x68] sm:$0xf]
        %v541 = vld [vmem:[#allocation8 + $0x6c] sm:$0xf]
        %v542 = vld [vmem:[#allocation8 + $0x70] sm:$0xf]
        %v543 = vld [vmem:[#allocation8 + $0x74] sm:$0xf]
        %v544 = vld [vmem:[#allocation8 + $0x78] sm:$0xf]
        %v545 = vld [vmem:[#allocation8 + $0x7c] sm:$0xf]
        %v546 = vld [vmem:[%s5] sm:$0x1]
        %v548 = vlaneseq
        %v549 = vshrl.u32 %v548, 7
        %v550 = vsub.s32 0, %v549
        %v551 = vrot.slane %v546, %v550
        %v585 = vunpack.c.l.b16 %v514
        %v586 = vunpack.c.l.b16 %v515
        %v587 = vunpack.c.l.b16 %v516
        %v588 = vunpack.c.l.b16 %v517
        %v589 = vunpack.c.l.b16 %v518
        %v590 = vunpack.c.l.b16 %v519
        %v591 = vunpack.c.l.b16 %v520
        %v592 = vunpack.c.l.b16 %v521
        %v593 = vunpack.c.l.b16 %v522
        %v594 = vunpack.c.l.b16 %v523
        %v595 = vunpack.c.l.b16 %v524
        %v596 = vunpack.c.l.b16 %v525
        %v597 = vunpack.c.l.b16 %v526
        %v598 = vunpack.c.l.b16 %v527
        %v599 = vunpack.c.l.b16 %v528
        %v600 = vunpack.c.l.b16 %v529
        %v601 = vunpack.c.l.b16 %v530
        %v602 = vunpack.c.l.b16 %v531
        %v603 = vunpack.c.l.b16 %v532
        %v604 = vunpack.c.l.b16 %v533
        %v605 = vunpack.c.l.b16 %v534
        %v606 = vunpack.c.l.b16 %v535
        %v607 = vunpack.c.l.b16 %v536
        %v608 = vunpack.c.l.b16 %v537
        %v609 = vunpack.c.l.b16 %v538
        %v610 = vunpack.c.l.b16 %v539
        %v611 = vunpack.c.l.b16 %v540
        %v612 = vunpack.c.l.b16 %v541
        %v613 = vunpack.c.l.b16 %v542
        %v614 = vunpack.c.l.b16 %v543
        %v615 = vunpack.c.l.b16 %v544
        %v616 = vunpack.c.l.b16 %v545
        %v617 = vpack.c.b16 %v586, %v585
        %v618 = vpack.c.b16 %v588, %v587
        %v619 = vpack.c.b16 %v590, %v589
        %v620 = vpack.c.b16 %v592, %v591
        %v621 = vpack.c.b16 %v594, %v593
        %v622 = vpack.c.b16 %v596, %v595
        %v623 = vpack.c.b16 %v598, %v597
        %v624 = vpack.c.b16 %v600, %v599
        %v625 = vpack.c.b16 %v602, %v601
        %v626 = vpack.c.b16 %v604, %v603
        %v627 = vpack.c.b16 %v606, %v605
        %v628 = vpack.c.b16 %v608, %v607
        %v629 = vpack.c.b16 %v610, %v609
        %v630 = vpack.c.b16 %v612, %v611
        %v631 = vpack.c.b16 %v614, %v613
        %v632 = vpack.c.b16 %v616, %v615
        %649 = vmatprep.subr.bf16.mxu0 0
        %650 = vmatpush1.bf16.msra.mxu0 %v617
        %651 = vmatprep.subr.bf16.mxu0 0
        %652 = vmatpush1.bf16.msra.mxu0 %v618
        %653 = vmatprep.subr.bf16.mxu0 0
        %654 = vmatpush1.bf16.msra.mxu0 %v619
        %655 = vmatprep.subr.bf16.mxu0 0
        %656 = vmatpush1.bf16.msra.mxu0 %v620
        %657 = vmatprep.subr.bf16.mxu0 0
        %658 = vmatpush1.bf16.msra.mxu0 %v621
        %659 = vmatprep.subr.bf16.mxu0 0
        %660 = vmatpush1.bf16.msra.mxu0 %v622
        %661 = vmatprep.subr.bf16.mxu0 0
        %662 = vmatpush1.bf16.msra.mxu0 %v623
        %663 = vmatprep.subr.bf16.mxu0 0
        %664 = vmatpush1.bf16.msra.mxu0 %v624
        %665 = vmatprep.subr.bf16.mxu0 0
        %666 = vmatpush1.bf16.msra.mxu0 %v625
        %667 = vmatprep.subr.bf16.mxu0 0
        %668 = vmatpush1.bf16.msra.mxu0 %v626
        %669 = vmatprep.subr.bf16.mxu0 0
        %670 = vmatpush1.bf16.msra.mxu0 %v627
        %671 = vmatprep.subr.bf16.mxu0 0
        %672 = vmatpush1.bf16.msra.mxu0 %v628
        %673 = vmatprep.subr.bf16.mxu0 0
        %674 = vmatpush1.bf16.msra.mxu0 %v629
        %675 = vmatprep.subr.bf16.mxu0 0
        %676 = vmatpush1.bf16.msra.mxu0 %v630
        %677 = vmatprep.subr.bf16.mxu0 0
        %678 = vmatpush1.bf16.msra.mxu0 %v631
        %679 = vmatprep.subr.bf16.mxu0 0
        %680 = vmatpush1.bf16.msra.mxu0 %v632
        %681 = vmatprep.mubr.bf16.mxu0 %v511
        %682 = vmatmul.mubr.bf16.gmra.mrb[0].mxu0 %v510
        %v683 = vpop.f32.mrb[0].mxu0
        %v684 = vadd.f32 %v551, %v683
        %v685 = vpop.f32.mrb[0].mxu0
        %v686 = vpop.f32.mrb[0].mxu0
        %v687 = vadd.f32 %v551, %v686
        %v688 = vpop.f32.mrb[0].mxu0
        %689 = vmatprep.mubr.bf16.mxu0 %v513
        %690 = vmatmul.mubr.bf16.gmra.mrb[0].mxu0 %v512
        %v691 = vpop.f32.mrb[0].mxu0
        %v692 = vadd.f32 %v551, %v691
        %v693 = vpop.f32.mrb[0].mxu0
        %v694 = vpop.f32.mrb[0].mxu0
        %v695 = vpop.f32.mrb[0].mxu0
        %696 = vdwg.mxu0
        %v697 = vld [vmem:[%s253] sm:$0x7]
        %v698 = vlaneseq
        %v699 = vshrl.u32 %v698, 7
        %v700 = vsub.s32 0, %v699
        %v701 = vrot.slane %v697, %v700
        %703 = vbcast.lane.b32.xlu0 %v701, 256
        %v704 = vpop.permute.xlu0 %703
        %v705 = vlaneseq
        %v706 = vshrl.u32 %v705, 7
        %v707 = vsub.s32 1, %v706
        %v708 = vrot.slane %v697, %v707
        %710 = vbcast.lane.b32.xlu0 %v708, 256
        %v711 = vpop.permute.xlu0 %710
        %v712 = vlaneseq
        %v713 = vshrl.u32 %v712, 7
        %v714 = vsub.s32 2, %v713
        %v715 = vrot.slane %v697, %v714
        %717 = vbcast.lane.b32.xlu0 %v715, 256
        %v718 = vpop.permute.xlu0 %717
        %v719 = vmul.f32 %v684, %v704
        %v720 = vmul.f32 %v687, %v711
        %v721 = vmul.f32 %v692, %v718
        %v722 = vrot.slane %v719, 4
        %v723 = vadd.f32 %v719, %v722
        %v724 = vrot.slane %v723, 2
        %v725 = vadd.f32 %v723, %v724
        %v726 = vrot.slane %v725, 1
        %v727 = vadd.f32 %v725, %v726
        %v728 = vrot.slane %v720, 4
        %v729 = vadd.f32 %v720, %v728
        %v730 = vrot.slane %v729, 2
        %v731 = vadd.f32 %v729, %v730
        %v732 = vrot.slane %v731, 1
        %v733 = vadd.f32 %v731, %v732
        %v734 = vrot.slane %v721, 4
        %v735 = vadd.f32 %v721, %v734
        %v736 = vrot.slane %v735, 2
        %v737 = vadd.f32 %v735, %v736
        %v738 = vrot.slane %v737, 1
        %v739 = vadd.f32 %v737, %v738
        %vm740 = vcmask 59392
        %v741 = vsel %vm740, %v697, 0.0
        %742 = vadd.xlane.f32.xlu0 %v741
        %v743 = vpop.xlane.xlu0 %742
        %v744 = vmax.f32 %v743, 1e-09
        %v746 = vrot.slane %v744, 1
        %v747 = vrot.slane %v744, 2
        %v751 = vrcp.pop %v744
        %v752 = vmul.f32 %v727, %v751
        %v753 = vrcp.pop %v746
        %v754 = vmul.f32 %v733, %v753
        %v755 = vrcp.pop %v747
        %v756 = vmul.f32 %v739, %v755
        %v760 = vrot.slane %v754, 7
        %vm761 = vcmask 1041409
        %v762 = vsel %vm761, %v760, %v752
        %v763 = vrot.slane %v756, 6
        %vm764 = vcmask 1042434
        %v765 = vsel %vm764, %v763, %v762
        %767 = vst [vmem:[%s257] sm:$0x7] %v765
        %p768 = scmp.lt.s32.totalorder %s26, 1
        %s769 = scalar_select %p768, %s26, 1
        %s770 = smul.addr %s769, 4
        %s771 = scalar_lea.vmem %s7, %s770
        // Predicated region
        $region67: #{tpu_custom_call.1} parent=39 // pred_check
          %p772 = pneg %p154
        $region68: #{tpu_custom_call.1} parent=39 // pred_check_branch
          %774 = sbr.rel (%p772) target = $region70
        $region69: #{tpu_custom_call.1} parent=39 // pred_region
          _
        $region70: #{tpu_custom_call.1} parent=39 // pred_fallthru
          _
      $region40: #{tpu_custom_call.1} parent=5 // pred_fallthru
        _
      %p775 = scmp.le.s32.totalorder 2, %s21
      // Predicated region
      $region71: #{tpu_custom_call.1} parent=5 // pred_check
        %p776 = pneg %p775
      $region72: #{tpu_custom_call.1} parent=5 // pred_check_branch
        %778 = sbr.rel (%p776) target = $region74
      $region73: #{tpu_custom_call.1} parent=5 // pred_region
        %s779 = ssub.s32 %s21, 2
        // Predicated region
        $region75: #{tpu_custom_call.1} parent=73 // pred_check
          %p780 = pneg %p160
        $region76: #{tpu_custom_call.1} parent=73 // pred_check_branch
          %782 = sbr.rel (%p780) target = $region78
        $region77: #{tpu_custom_call.1} parent=73 // pred_region
          %p783 = scmp.lt.s32.totalorder %s27, 1
          %s784 = scalar_select %p783, %s27, 1
          %s785 = smul.addr %s784, 4
          %s786 = scalar_lea.vmem %s7, %s785
        $region78: #{tpu_custom_call.1} parent=73 // pred_fallthru
          _
      $region74: #{tpu_custom_call.1} parent=5 // pred_fallthru
        _
    $region6: #{tpu_custom_call.1} parent=1 // loop_footer
      %s25 = sadd.s32 1, %s21
    $region7: #{tpu_custom_call.1} parent=1 // loop_footer_branch
      %20 = sbr.rel target = $region3
    $region8: #{tpu_custom_call.1} parent=1 // loop_exit
      _
    %787 = vsyncpa [#allocation7], 1
    %s788 = scalar_lea.sflag [#allocation7], 1
    %789 = vsyncpa %s788, 1
    %790 = vsyncpa [#allocation9], 1
  %791 = vsyncmov [#allocation3]
  %s792 = vpop.sfrf %791
  %p793 = scmp.eq.s32.totalorder %s792, 0
  %p794 = pneg %p793
  %796 = shalt.err (%p794)
  %s797 = scalar_lea.sflag [#allocation3], 1
  %798 = vsyncmov %s797
  %s799 = vpop.sfrf %798
  %p800 = scmp.eq.s32.totalorder %s799, 0
  %p801 = pneg %p800
  %803 = shalt.err (%p801)
  %s804 = scalar_lea.sflag [#allocation3], 2
  %805 = vsyncmov %s804
  %s806 = vpop.sfrf %805
  %p807 = scmp.eq.s32.totalorder %s806, 0
  %p808 = pneg %p807
  %810 = shalt.err (%p808)
  %s811 = scalar_lea.sflag [#allocation3], 3
  %812 = vsyncmov %s811
  %s813 = vpop.sfrf %812
  %p814 = scmp.eq.s32.totalorder %s813, 0
  %p815 = pneg %p814
  %817 = shalt.err (%p815)
  %s818 = scalar_lea.sflag [#allocation3], 4
  %819 = vsyncmov %s818
  %s820 = vpop.sfrf %819
  %p821 = scmp.eq.s32.totalorder %s820, 0
  %p822 = pneg %p821
  %824 = shalt.err (%p822)
  %s825 = scalar_lea.sflag [#allocation3], 5
  %826 = vsyncmov %s825
  %s827 = vpop.sfrf %826
  %p828 = scmp.eq.s32.totalorder %s827, 0
  %p829 = pneg %p828
  %831 = shalt.err (%p829)
  %s832 = scalar_lea.sflag [#allocation3], 6
  %833 = vsyncmov %s832
  %s834 = vpop.sfrf %833
  %p835 = scmp.eq.s32.totalorder %s834, 0
  %p836 = pneg %p835
  %838 = shalt.err (%p836)
  %s839 = scalar_lea.sflag [#allocation3], 7
  %840 = vsyncmov %s839
  %s841 = vpop.sfrf %840
  %p842 = scmp.eq.s32.totalorder %s841, 0
  %p843 = pneg %p842
  %845 = shalt.err (%p843)
  %s846 = scalar_lea.sflag [#allocation3], 8
  %847 = vsyncmov %s846
  %s848 = vpop.sfrf %847
  %p849 = scmp.eq.s32.totalorder %s848, 0
  %p850 = pneg %p849
  %852 = shalt.err (%p850)
  %s853 = scalar_lea.sflag [#allocation3], 9
  %854 = vsyncmov %s853
  %s855 = vpop.sfrf %854
  %p856 = scmp.eq.s32.totalorder %s855, 0
  %p857 = pneg %p856
  %859 = shalt.err (%p857)
  %s860 = scalar_lea.sflag [#allocation3], 10
  %861 = vsyncmov %s860
  %s862 = vpop.sfrf %861
  %p863 = scmp.eq.s32.totalorder %s862, 0
  %p864 = pneg %p863
  %866 = shalt.err (%p864)
  %s867 = scalar_lea.sflag [#allocation3], 11
  %868 = vsyncmov %s867
  %s869 = vpop.sfrf %868
  %p870 = scmp.eq.s32.totalorder %s869, 0
  %p871 = pneg %p870
  %873 = shalt.err (%p871)
  %s874 = scalar_lea.sflag [#allocation3], 12
  %875 = vsyncmov %s874
  %s876 = vpop.sfrf %875
  %p877 = scmp.eq.s32.totalorder %s876, 0
  %p878 = pneg %p877
  %880 = shalt.err (%p878)
  %s881 = scalar_lea.sflag [#allocation3], 13
  %882 = vsyncmov %s881
  %s883 = vpop.sfrf %882
  %p884 = scmp.eq.s32.totalorder %s883, 0
  %p885 = pneg %p884
  %887 = shalt.err (%p885)
  %s888 = scalar_lea.sflag [#allocation3], 14
  %889 = vsyncmov %s888
  %s890 = vpop.sfrf %889
  %p891 = scmp.eq.s32.totalorder %s890, 0
  %p892 = pneg %p891
  %894 = shalt.err (%p892)
  %s895 = scalar_lea.sflag [#allocation3], 15
  %896 = vsyncmov %s895
  %s897 = vpop.sfrf %896
  %p898 = scmp.eq.s32.totalorder %s897, 0
  %p899 = pneg %p898
  %901 = shalt.err (%p899)
  %s902 = scalar_lea.sflag [#allocation3], 16
  %903 = vsyncmov %s902
  %s904 = vpop.sfrf %903
  %p905 = scmp.eq.s32.totalorder %s904, 0
  %p906 = pneg %p905
  %908 = shalt.err (%p906)
  %s909 = scalar_lea.sflag [#allocation3], 17
  %910 = vsyncmov %s909
  %s911 = vpop.sfrf %910
  %p912 = scmp.eq.s32.totalorder %s911, 0
  %p913 = pneg %p912
  %915 = shalt.err (%p913)
  %s916 = scalar_lea.sflag [#allocation3], 18
  %917 = vsyncmov %s916
  %s918 = vpop.sfrf %917
  %p919 = scmp.eq.s32.totalorder %s918, 0
  %p920 = pneg %p919
  %922 = shalt.err (%p920)
  %s923 = scalar_lea.sflag [#allocation3], 19
  %924 = vsyncmov %s923
  %s925 = vpop.sfrf %924
  %p926 = scmp.eq.s32.totalorder %s925, 0
  %p927 = pneg %p926
  %929 = shalt.err (%p927)
  %s930 = scalar_lea.sflag [#allocation3], 20
  %931 = vsyncmov %s930
  %s932 = vpop.sfrf %931
  %p933 = scmp.eq.s32.totalorder %s932, 0
  %p934 = pneg %p933
  %936 = shalt.err (%p934)
  %s937 = scalar_lea.sflag [#allocation3], 21
  %938 = vsyncmov %s937
  %s939 = vpop.sfrf %938
  %p940 = scmp.eq.s32.totalorder %s939, 0
  %p941 = pneg %p940
  %943 = shalt.err (%p941)
  %s944 = scalar_lea.sflag [#allocation3], 22
  %945 = vsyncmov %s944
  %s946 = vpop.sfrf %945
  %p947 = scmp.eq.s32.totalorder %s946, 0
  %p948 = pneg %p947
  %950 = shalt.err (%p948)
  %s951 = scalar_lea.sflag [#allocation3], 23
  %952 = vsyncmov %s951
  %s953 = vpop.sfrf %952
  %p954 = scmp.eq.s32.totalorder %s953, 0
  %p955 = pneg %p954
  %957 = shalt.err (%p955)

</llo_original>
